<compile_context>
chip_gen: v6e
topology: v6e:2x2x1
jax: 0.10.0
libtpu: 0.0.40
codegen_flags: <defaults>
</compile_context>

<pallas_src>
import functools

import jax
import jax.numpy as jnp
from jax.experimental import pallas as pl
from jax.experimental.pallas import tpu as pltpu


def _round_up(x: int, m: int) -> int:
    return (x + m - 1) // m * m


def _tpu_vmem_capacity() -> int:
    try:
        return int(pltpu.get_tpu_info().vmem_capacity_bytes)
    except Exception:  # interpret mode / CPU / older jax: assume 128 MiB
        return 128 * 1024 * 1024


def _largest_divisor_leq(m: int, cap: int) -> int:
    cap = max(1, min(cap, m))
    for dd in range(cap, 0, -1):
        if m % dd == 0:
            return dd
    return 1


def _pick_block_n(n: int, per_col_bytes: int, vmem_capacity: int, block_n=None) -> int:
    """Spatial (lane-axis) tile size from a VMEM working-set budget."""
    n128 = _round_up(max(n, 1), 128)
    if block_n is not None:
        return min(_round_up(block_n, 128), n128)
    budget = min(vmem_capacity // 4, 16 << 20)          # streamed-tile budget
    bn = max(128, min(budget // max(per_col_bytes, 1), 32768))
    # Prefer a tile that divides round_up(n, 128): avoids the extra pad copy of x.
    return 128 * _largest_divisor_leq(n128 // 128, bn // 128)


def _vmem_limit_bytes(bn: int, per_col_bytes: int, vmem_capacity: int) -> int:
    need = bn * per_col_bytes + (8 << 20)                # tiles + weights + margin
    cap = max(16 << 20, min(vmem_capacity // 2, 64 << 20))   # 32 MiB on v7x
    return int(min(max(need, 16 << 20), cap))


# --------------------------------------------------------------------------
# Pass 1: stacked projection + streaming global-descriptor kernel.
#   - online softmax over N (lanes) for B, fused with the G^T matmul
#   - running softmax statistics over N for V (finalized in XLA)
#   - streams the bf16 V projection out for pass 2
# --------------------------------------------------------------------------
def _descriptor_kernel(x_ref, w_ref, b_ref,
                       gacc_ref, lb_ref, mv_ref, lv_ref, vproj_ref,
                       mb_ref,
                       *, block_n, n_valid, c_m, c_n, mxu_dtype):
    ni = pl.program_id(1)

    @pl.when(ni == 0)
    def _init():
        gacc_ref[...] = jnp.zeros_like(gacc_ref)
        lb_ref[...] = jnp.zeros_like(lb_ref)
        lv_ref[...] = jnp.zeros_like(lv_ref)
        mv_ref[...] = jnp.full_like(mv_ref, -jnp.inf)
        mb_ref[...] = jnp.full_like(mb_ref, -jnp.inf)

    x = x_ref[0].astype(mxu_dtype)                          # (C, bn), lane-dense
    # one stacked projection for A|B|V: (c_m + 2*c_n, bn), f32 accumulation
    proj = jax.lax.dot_general(
        w_ref[...], x, (((1,), (0,)), ((), ())),
        preferred_element_type=jnp.float32) + b_ref[...]
    a = proj[:c_m]                                          # (c_m, bn)
    bmat = proj[c_m:c_m + c_n]                              # (c_n, bn)
    v = proj[c_m + c_n:]                                    # (c_n, bn)

    if n_valid % block_n != 0:                              # mask padded voxels
        col = ni * block_n + jax.lax.broadcasted_iota(jnp.int32, (1, block_n), 1)
        pad = col >= n_valid
        bmat = jnp.where(pad, -jnp.inf, bmat)
        v = jnp.where(pad, -jnp.inf, v)

    # Stream V for pass 2; compute its softmax statistics from the SAME
    # (mxu_dtype-rounded) values pass 2 will read, so the softmax stays exact.
    v_mx = v.astype(mxu_dtype)
    vproj_ref[0] = v_mx
    v = v_mx.astype(jnp.float32)

    # ---- online softmax over N for B, fused with the (transposed) G matmul ----
    mb_old = mb_ref[...]                                    # (c_n, 1)
    mb_new = jnp.maximum(mb_old, jnp.max(bmat, axis=1, keepdims=True))
    corr_b = jnp.exp(mb_old - mb_new)
    p_b = jnp.exp(bmat - mb_new)                            # (c_n, bn)
    lb_ref[0] = corr_b * lb_ref[0] + jnp.sum(p_b, axis=1, keepdims=True)
    # G^T numerator: (c_n, c_m); contraction over the lane (N) axis.
    gacc_ref[0] = gacc_ref[0] * corr_b + jax.lax.dot_general(
        p_b.astype(mxu_dtype), a.astype(mxu_dtype),
        (((1,), (1,)), ((), ())), preferred_element_type=jnp.float32)
    mb_ref[...] = mb_new

    # ---- running softmax statistics over N for V (consumed by pass 2) ----
    mv_old = mv_ref[0]
    mv_new = jnp.maximum(mv_old, jnp.max(v, axis=1, keepdims=True))
    corr_v = jnp.exp(mv_old - mv_new)
    lv_ref[0] = corr_v * lv_ref[0] + jnp.sum(jnp.exp(v - mv_new),
                                             axis=1, keepdims=True)
    mv_ref[0] = mv_new


# --------------------------------------------------------------------------
# Pass 2: distribute descriptors + (folded) reconstruct conv.
#   out = W2 @ exp(V - m_V) + br      with W2 = wr @ G / l_V  (built in XLA)
# --------------------------------------------------------------------------
def _distribute_kernel(*refs, res, mxu_dtype):
    if res:
        v_ref, x_ref, w2_ref, b2_ref, vmax_ref, o_ref = refs
    else:
        v_ref, w2_ref, b2_ref, vmax_ref, o_ref = refs
        x_ref = None
    v = v_ref[0].astype(jnp.float32)                        # (c_n, bn)
    att = jnp.exp(v - vmax_ref[0])                          # 1/l_V folded into W2
    out = jax.lax.dot_general(
        w2_ref[0], att.astype(mxu_dtype), (((1,), (0,)), ((), ())),
        preferred_element_type=jnp.float32) + b2_ref[...]   # (out_c, bn)
    if res:
        out = out + x_ref[0].astype(jnp.float32)            # original-dtype residual
    o_ref[0] = out.astype(o_ref.dtype)                      # lane-dense store


# --------------------------------------------------------------------------
# Wrapper
# --------------------------------------------------------------------------
def double_attention(x, params, *, c_m, c_n, reconstruct=True, res=False,
                     block_n=None, mxu_dtype=jnp.bfloat16, out_dtype=None):
    """Pallas TPU forward pass of DoubleAttention (A^2 attention, 3-D)."""
    b, C, h, w, d = x.shape
    n = h * w * d
    out_c = C if reconstruct else c_m
    if res and not reconstruct:
        assert c_m == C, "res=True with reconstruct=False requires c_m == in_channels"
    # Tip: pass out_dtype=jnp.bfloat16 to halve the largest HBM stream (pass-2 output).
    out_dtype = x.dtype if out_dtype is None else out_dtype
    mxu_dtype = jnp.dtype(mxu_dtype)
    x_it = jnp.dtype(x.dtype).itemsize
    mx_it = mxu_dtype.itemsize
    out_it = jnp.dtype(out_dtype).itemsize
    p_all = c_m + 2 * c_n

    # streamed working-set bytes per lane column (double-buffered IO + f32 temps)
    per_col_1 = 2 * C * x_it + 2 * c_n * mx_it + p_all * 4 + 3 * c_n * 4
    per_col_2 = (2 * c_n * mx_it + 2 * out_c * out_it + (c_n + out_c) * 4
                 + (2 * C * x_it if res else 0))
    per_col = max(per_col_1, per_col_2)

    vmem_cap = _tpu_vmem_capacity()
    bn = _pick_block_n(n, per_col, vmem_cap, block_n)
    n_pad = _round_up(n, bn)
    n_tiles = n_pad // bn
    vmem_limit = _vmem_limit_bytes(bn, per_col, vmem_cap)

    # channel-major flattened voxels: a pure reshape of NCDHW, no XLA transpose.
    x_r = x.reshape(b, C, n)
    if n_pad != n:
        x_r = jnp.pad(x_r, ((0, 0), (0, 0), (0, n_pad - n)))

    wa = jnp.asarray(params["wa"])                          # (c_m, C)
    wb = jnp.asarray(params["wb"])                          # (c_n, C)
    wv = jnp.asarray(params["wv"])                          # (c_n, C)
    w_all = jnp.concatenate([wa, wb, wv], axis=0).astype(mxu_dtype)   # (P, C)
    b_all = jnp.concatenate(
        [jnp.asarray(params["ba"]), jnp.asarray(params["bb"]),
         jnp.asarray(params["bv"])]).astype(jnp.float32).reshape(p_all, 1)

    grid = (b, n_tiles)
    resident = lambda bi, ni: (0, 0)            # weights stay resident in VMEM
    per_batch = lambda bi, ni: (bi, 0, 0)
    streamed = lambda bi, ni: (bi, 0, ni)

    # ---------------- pass 1: projections + global descriptors -------------
    k1 = functools.partial(_descriptor_kernel, block_n=bn, n_valid=n,
                           c_m=c_m, c_n=c_n, mxu_dtype=mxu_dtype)
    acc_t, l_b, v_max, v_sum, v_proj = pl.pallas_call(
        k1,
        out_shape=(
            jax.ShapeDtypeStruct((b, c_n, c_m), jnp.float32),   # G^T numerator
            jax.ShapeDtypeStruct((b, c_n, 1), jnp.float32),     # softmax_N(B) denom
            jax.ShapeDtypeStruct((b, c_n, 1), jnp.float32),     # max_N V
            jax.ShapeDtypeStruct((b, c_n, 1), jnp.float32),     # sum_N exp(V - max)
            jax.ShapeDtypeStruct((b, c_n, n_pad), mxu_dtype),   # V projection
        ),
        grid_spec=pltpu.PrefetchScalarGridSpec(
            num_scalar_prefetch=0,
            grid=grid,
            in_specs=[
                pl.BlockSpec((1, C, bn), streamed),
                pl.BlockSpec((p_all, C), resident),
                pl.BlockSpec((p_all, 1), resident),
            ],
            out_specs=(
                pl.BlockSpec((1, c_n, c_m), per_batch),
                pl.BlockSpec((1, c_n, 1), per_batch),
                pl.BlockSpec((1, c_n, 1), per_batch),
                pl.BlockSpec((1, c_n, 1), per_batch),
                pl.BlockSpec((1, c_n, bn), streamed),
            ),
            scratch_shapes=[pltpu.VMEM((c_n, 1), jnp.float32)],   # running max of B
        ),
        compiler_params=pltpu.CompilerParams(
            dimension_semantics=("parallel", "arbitrary"),
            vmem_limit_bytes=vmem_limit,
        ),
    )(x_r, w_all, b_all)
    # TODO(synk): on v7x with b < 2, add a second "parallel" grid axis splitting N
    # in half and merge the per-half online-softmax partials in XLA so the second
    # TensorCore is not idle during pass 1.

    # -------- fold G, softmax denominators and the reconstruct conv (tiny, f32) ----
    g_t = acc_t / l_b                                        # (b, c_n, c_m) == G^T
    if reconstruct:
        wr = jnp.asarray(params["wr"], jnp.float32)          # (C, c_m)
        w2 = jnp.einsum("cm,bkm->bck", wr, g_t)              # (b, C, c_n) = wr @ G
        b2 = jnp.asarray(params["br"], jnp.float32).reshape(out_c, 1)
    else:
        w2 = jnp.transpose(g_t, (0, 2, 1))                   # (b, c_m, c_n) = G
        b2 = jnp.zeros((out_c, 1), jnp.float32)
    w2 = (w2 / jnp.transpose(v_sum, (0, 2, 1))).astype(mxu_dtype)

    # ---------------- pass 2: distribute + reconstruct ---------------------
    k2 = functools.partial(_distribute_kernel, res=res, mxu_dtype=mxu_dtype)
    in_specs = [pl.BlockSpec((1, c_n, bn), streamed)]
    args = [v_proj]
    if res:
        in_specs.append(pl.BlockSpec((1, C, bn), streamed))
        args.append(x_r)
    in_specs += [
        pl.BlockSpec((1, out_c, c_n), per_batch),
        pl.BlockSpec((out_c, 1), resident),
        pl.BlockSpec((1, c_n, 1), per_batch),
    ]
    args += [w2, b2, v_max]
    out_flat = pl.pallas_call(
        k2,
        out_shape=jax.ShapeDtypeStruct((b, out_c, n_pad), out_dtype),
        grid_spec=pltpu.PrefetchScalarGridSpec(
            num_scalar_prefetch=0,
            grid=grid,
            in_specs=in_specs,
            out_specs=pl.BlockSpec((1, out_c, bn), streamed),
        ),
        compiler_params=pltpu.CompilerParams(
            dimension_semantics=("parallel", "parallel"),
            vmem_limit_bytes=vmem_limit,
        ),
    )(*args)

    if n_pad != n:
        out_flat = out_flat[:, :, :n]
    return out_flat.reshape(b, out_c, h, w, d)


# --------------------------------------------------------------------------
# Pure-JAX reference (mirrors the PyTorch forward) for a sanity check.
# --------------------------------------------------------------------------
def double_attention_reference(x, params, *, c_m, c_n, reconstruct=True, res=False):
    b, C, h, w, d = x.shape
    n = h * w * d
    xf = x.reshape(b, C, n).astype(jnp.float32)
    A = jnp.einsum("mc,bcn->bmn", params["wa"], xf) + params["ba"][None, :, None]
    B = jnp.einsum("kc,bcn->bkn", params["wb"], xf) + params["bb"][None, :, None]
    V = jnp.einsum("kc,bcn->bkn", params["wv"], xf) + params["bv"][None, :, None]
    att_maps = jax.nn.softmax(B, axis=-1)
    att_vecs = jax.nn.softmax(V, axis=-1)
    G = jnp.einsum("bmn,bkn->bmk", A, att_maps)
    Z = jnp.einsum("bmk,bkn->bmn", G, att_vecs)
    if reconstruct:
        Z = jnp.einsum("cm,bmn->bcn", params["wr"], Z) + params["br"][None, :, None]
    out = Z.reshape(b, -1, h, w, d)
    if res:
        out = out + x
    return out


if __name__ == "__main__":
    key = jax.random.PRNGKey(0)
    b, C, h, w, d = 2, 32, 8, 8, 8            # N = 512 voxels per batch
    c_m, c_n = 32, 16
    keys = jax.random.split(key, 5)

    def kaiming(k, shape):                    # fan_out kaiming-normal (module init)
        return jax.random.normal(k, shape, jnp.float32) * jnp.sqrt(2.0 / shape[0])

    x = jax.random.normal(keys[0], (b, C, h, w, d), jnp.float32)
    params = dict(
        wa=kaiming(keys[1], (c_m, C)), ba=jnp.zeros((c_m,), jnp.float32),
        wb=kaiming(keys[2], (c_n, C)), bb=jnp.zeros((c_n,), jnp.float32),
        wv=kaiming(keys[3], (c_n, C)), bv=jnp.zeros((c_n,), jnp.float32),
        wr=kaiming(keys[4], (C, c_m)), br=jnp.zeros((C,), jnp.float32),
    )

    # block_n=128 forces 4 spatial tiles per batch -> exercises the online softmax.
    out = double_attention(x, params, c_m=c_m, c_n=c_n, block_n=128)
    out = jax.block_until_ready(out)
    assert out.shape == (b, C, h, w, d), out.shape

    ref = double_attention_reference(x, params, c_m=c_m, c_n=c_n)
    err = float(jnp.max(jnp.abs(out.astype(jnp.float32) - ref)))
    scale = float(jnp.max(jnp.abs(ref))) + 1e-6
    if not (err / scale < 0.05):              # bf16 MXU feeds; softmax math in f32
        raise AssertionError(
            f"kernel/reference mismatch: normalized max err = {err / scale:.4f}")
    print("KERNEL_OK")
</pallas_src>

<mosaic_0001>
module attributes {stable_mosaic.version = 11 : i64} {
  func.func @_descriptor_kernel(%arg0: i32, %arg1: i32, %arg2: memref<1x32x128xf32, #tpu.memory_space<vmem>>, %arg3: memref<64x32xbf16, #tpu.memory_space<vmem>>, %arg4: memref<64x1xf32, #tpu.memory_space<vmem>>, %arg5: memref<1x16x32xf32, #tpu.memory_space<vmem>>, %arg6: memref<1x16x1xf32, #tpu.memory_space<vmem>>, %arg7: memref<1x16x1xf32, #tpu.memory_space<vmem>>, %arg8: memref<1x16x1xf32, #tpu.memory_space<vmem>>, %arg9: memref<1x16x128xbf16, #tpu.memory_space<vmem>>, %arg10: memref<16x1xf32, #tpu.memory_space<vmem>>) attributes {dimension_semantics = [#tpu.dimension_semantics<parallel>, #tpu.dimension_semantics<arbitrary>], iteration_bounds = array<i64: 2, 4>, scalar_prefetch = 0 : i64, scratch_operands = 1 : i64, tpu.core_type = #tpu.core_type<tc>, window_params = [{transform_indices = @transform_0, window_bounds = array<i64: 1, 32, 128>}, {pipeline_mode = #tpu.pipeline_mode<synchronous>, transform_indices = @transform_1, window_bounds = array<i64: 64, 32>}, {pipeline_mode = #tpu.pipeline_mode<synchronous>, transform_indices = @transform_2, window_bounds = array<i64: 64, 1>}, {transform_indices = @transform_3, window_bounds = array<i64: 1, 16, 32>}, {transform_indices = @transform_4, window_bounds = array<i64: 1, 16, 1>}, {transform_indices = @transform_5, window_bounds = array<i64: 1, 16, 1>}, {transform_indices = @transform_6, window_bounds = array<i64: 1, 16, 1>}, {transform_indices = @transform_7, window_bounds = array<i64: 1, 16, 128>}]} {
    %c0_i32 = arith.constant 0 : i32
    %0 = arith.cmpi eq, %arg1, %c0_i32 : i32
    %1 = arith.extui %0 : i1 to i32
    %c0_i32_0 = arith.constant 0 : i32
    %2 = arith.cmpi ne, %1, %c0_i32_0 : i32
    scf.if %2 {
      %cst_43 = arith.constant 0.000000e+00 : f32
      %71 = vector.broadcast %cst_43 : f32 to vector<1x16x32xf32>
      %c0_44 = arith.constant 0 : index
      %c0_45 = arith.constant 0 : index
      %c0_46 = arith.constant 0 : index
      %72 = vector.load %arg5[%c0_44, %c0_45, %c0_46] : memref<1x16x32xf32, #tpu.memory_space<vmem>>, vector<1x16x32xf32>
      tpu.vector_store %arg5[%c0_44, %c0_45, %c0_46], %71 {strides = array<i32>} : memref<1x16x32xf32, #tpu.memory_space<vmem>>, vector<1x16x32xf32>,
      %cst_47 = arith.constant 0.000000e+00 : f32
      %73 = vector.broadcast %cst_47 : f32 to vector<1x16x1xf32>
      %c0_48 = arith.constant 0 : index
      %c0_49 = arith.constant 0 : index
      %c0_50 = arith.constant 0 : index
      %74 = vector.load %arg6[%c0_48, %c0_49, %c0_50] : memref<1x16x1xf32, #tpu.memory_space<vmem>>, vector<1x16x1xf32>
      tpu.vector_store %arg6[%c0_48, %c0_49, %c0_50], %73 {strides = array<i32>} : memref<1x16x1xf32, #tpu.memory_space<vmem>>, vector<1x16x1xf32>,
      %cst_51 = arith.constant 0.000000e+00 : f32
      %75 = vector.broadcast %cst_51 : f32 to vector<1x16x1xf32>
      %c0_52 = arith.constant 0 : index
      %c0_53 = arith.constant 0 : index
      %c0_54 = arith.constant 0 : index
      %76 = vector.load %arg8[%c0_52, %c0_53, %c0_54] : memref<1x16x1xf32, #tpu.memory_space<vmem>>, vector<1x16x1xf32>
      tpu.vector_store %arg8[%c0_52, %c0_53, %c0_54], %75 {strides = array<i32>} : memref<1x16x1xf32, #tpu.memory_space<vmem>>, vector<1x16x1xf32>,
      %cst_55 = arith.constant 0xFF800000 : f32
      %77 = vector.broadcast %cst_55 : f32 to vector<1x16x1xf32>
      %c0_56 = arith.constant 0 : index
      %c0_57 = arith.constant 0 : index
      %c0_58 = arith.constant 0 : index
      %78 = vector.load %arg7[%c0_56, %c0_57, %c0_58] : memref<1x16x1xf32, #tpu.memory_space<vmem>>, vector<1x16x1xf32>
      tpu.vector_store %arg7[%c0_56, %c0_57, %c0_58], %77 {strides = array<i32>} : memref<1x16x1xf32, #tpu.memory_space<vmem>>, vector<1x16x1xf32>,
      %cst_59 = arith.constant 0xFF800000 : f32
      %79 = vector.broadcast %cst_59 : f32 to vector<16x1xf32>
      %c0_60 = arith.constant 0 : index
      %c0_61 = arith.constant 0 : index
      %80 = vector.load %arg10[%c0_60, %c0_61] : memref<16x1xf32, #tpu.memory_space<vmem>>, vector<16x1xf32>
      tpu.vector_store %arg10[%c0_60, %c0_61], %79 {strides = array<i32>} : memref<16x1xf32, #tpu.memory_space<vmem>>, vector<16x1xf32>,
    } else {
    }
    %c0 = arith.constant 0 : index
    %c0_1 = arith.constant 0 : index
    %c0_2 = arith.constant 0 : index
    %3 = vector.load %arg2[%c0, %c0_1, %c0_2] : memref<1x32x128xf32, #tpu.memory_space<vmem>>, vector<1x32x128xf32>
    %4 = vector.shape_cast %3 : vector<1x32x128xf32> to vector<32x128xf32>
    %5 = arith.truncf %4 : vector<32x128xf32> to vector<32x128xbf16>
    %c0_3 = arith.constant 0 : index
    %c0_4 = arith.constant 0 : index
    %6 = vector.load %arg3[%c0_3, %c0_4] : memref<64x32xbf16, #tpu.memory_space<vmem>>, vector<64x32xbf16>
    %cst = arith.constant dense<0.000000e+00> : vector<64x128xf32>
    %7 = tpu.matmul %6, %5, %cst {dimension_numbers = #tpu.dot_dimension_numbers<[1], [0], [0], [1], [0, 0, 1, 1], [], []>} : vector<64x32xbf16>, vector<32x128xbf16>, vector<64x128xf32> -> vector<64x128xf32>
    %c0_5 = arith.constant 0 : index
    %c0_6 = arith.constant 0 : index
    %8 = vector.load %arg4[%c0_5, %c0_6] : memref<64x1xf32, #tpu.memory_space<vmem>>, vector<64x1xf32>
    %9 = vector.broadcast %8 : vector<64x1xf32> to vector<64x128xf32>
    %10 = arith.addf %7, %9 : vector<64x128xf32>
    %11 = vector.extract_strided_slice %10 {offsets = [0, 0], sizes = [32, 128], strides = [1, 1]} : vector<64x128xf32> to vector<32x128xf32>
    %12 = vector.extract_strided_slice %10 {offsets = [32, 0], sizes = [16, 128], strides = [1, 1]} : vector<64x128xf32> to vector<16x128xf32>
    %13 = vector.extract_strided_slice %10 {offsets = [48, 0], sizes = [16, 128], strides = [1, 1]} : vector<64x128xf32> to vector<16x128xf32>
    %14 = arith.truncf %13 : vector<16x128xf32> to vector<16x128xbf16>
    %c0_7 = arith.constant 0 : index
    %c0_8 = arith.constant 0 : index
    %c0_9 = arith.constant 0 : index
    %15 = vector.load %arg9[%c0_7, %c0_8, %c0_9] : memref<1x16x128xbf16, #tpu.memory_space<vmem>>, vector<1x16x128xbf16>
    %16 = vector.shape_cast %15 : vector<1x16x128xbf16> to vector<16x128xbf16>
    %17 = vector.shape_cast %14 : vector<16x128xbf16> to vector<1x16x128xbf16>
    tpu.vector_store %arg9[%c0_7, %c0_8, %c0_9], %17 {strides = array<i32>} : memref<1x16x128xbf16, #tpu.memory_space<vmem>>, vector<1x16x128xbf16>,
    %18 = arith.extf %14 : vector<16x128xbf16> to vector<16x128xf32>
    %c0_10 = arith.constant 0 : index
    %c0_11 = arith.constant 0 : index
    %19 = vector.load %arg10[%c0_10, %c0_11] : memref<16x1xf32, #tpu.memory_space<vmem>>, vector<16x1xf32>
    %cst_12 = arith.constant dense<0xFF800000> : vector<16xf32>
    %20 = vector.multi_reduction <maximumf>, %12, %cst_12 [1] : vector<16x128xf32> to vector<16xf32>
    %21 = vector.shape_cast %20 : vector<16xf32> to vector<16x1xf32>
    %22 = arith.maximumf %19, %21 : vector<16x1xf32>
    %23 = arith.subf %19, %22 : vector<16x1xf32>
    %24 = math.exp %23 : vector<16x1xf32>
    %25 = vector.broadcast %22 : vector<16x1xf32> to vector<16x128xf32>
    %26 = arith.subf %12, %25 : vector<16x128xf32>
    %27 = math.exp %26 : vector<16x128xf32>
    %c0_13 = arith.constant 0 : index
    %c0_14 = arith.constant 0 : index
    %c0_15 = arith.constant 0 : index
    %28 = vector.load %arg6[%c0_13, %c0_14, %c0_15] : memref<1x16x1xf32, #tpu.memory_space<vmem>>, vector<1x16x1xf32>
    %29 = vector.shape_cast %28 : vector<1x16x1xf32> to vector<16x1xf32>
    %30 = arith.mulf %24, %29 : vector<16x1xf32>
    %cst_16 = arith.constant dense<0.000000e+00> : vector<16xf32>
    %31 = vector.multi_reduction <add>, %27, %cst_16 [1] : vector<16x128xf32> to vector<16xf32>
    %32 = vector.shape_cast %31 : vector<16xf32> to vector<16x1xf32>
    %33 = arith.addf %30, %32 : vector<16x1xf32>
    %c0_17 = arith.constant 0 : index
    %c0_18 = arith.constant 0 : index
    %c0_19 = arith.constant 0 : index
    %34 = vector.load %arg6[%c0_17, %c0_18, %c0_19] : memref<1x16x1xf32, #tpu.memory_space<vmem>>, vector<1x16x1xf32>
    %35 = vector.shape_cast %34 : vector<1x16x1xf32> to vector<16x1xf32>
    %36 = vector.shape_cast %33 : vector<16x1xf32> to vector<1x16x1xf32>
    tpu.vector_store %arg6[%c0_17, %c0_18, %c0_19], %36 {strides = array<i32>} : memref<1x16x1xf32, #tpu.memory_space<vmem>>, vector<1x16x1xf32>,
    %c0_20 = arith.constant 0 : index
    %c0_21 = arith.constant 0 : index
    %c0_22 = arith.constant 0 : index
    %37 = vector.load %arg5[%c0_20, %c0_21, %c0_22] : memref<1x16x32xf32, #tpu.memory_space<vmem>>, vector<1x16x32xf32>
    %38 = vector.shape_cast %37 : vector<1x16x32xf32> to vector<16x32xf32>
    %39 = vector.broadcast %24 : vector<16x1xf32> to vector<16x32xf32>
    %40 = arith.mulf %38, %39 : vector<16x32xf32>
    %41 = arith.truncf %27 : vector<16x128xf32> to vector<16x128xbf16>
    %42 = arith.truncf %11 : vector<32x128xf32> to vector<32x128xbf16>
    %cst_23 = arith.constant dense<0.000000e+00> : vector<16x32xf32>
    %43 = tpu.matmul %41, %42, %cst_23 {dimension_numbers = #tpu.dot_dimension_numbers<[1], [1], [0], [0], [0, 0, 1, 0], [], []>} : vector<16x128xbf16>, vector<32x128xbf16>, vector<16x32xf32> -> vector<16x32xf32>
    %44 = arith.addf %40, %43 : vector<16x32xf32>
    %c0_24 = arith.constant 0 : index
    %c0_25 = arith.constant 0 : index
    %c0_26 = arith.constant 0 : index
    %45 = vector.load %arg5[%c0_24, %c0_25, %c0_26] : memref<1x16x32xf32, #tpu.memory_space<vmem>>, vector<1x16x32xf32>
    %46 = vector.shape_cast %45 : vector<1x16x32xf32> to vector<16x32xf32>
    %47 = vector.shape_cast %44 : vector<16x32xf32> to vector<1x16x32xf32>
    tpu.vector_store %arg5[%c0_24, %c0_25, %c0_26], %47 {strides = array<i32>} : memref<1x16x32xf32, #tpu.memory_space<vmem>>, vector<1x16x32xf32>,
    %c0_27 = arith.constant 0 : index
    %c0_28 = arith.constant 0 : index
    %48 = vector.load %arg10[%c0_27, %c0_28] : memref<16x1xf32, #tpu.memory_space<vmem>>, vector<16x1xf32>
    tpu.vector_store %arg10[%c0_27, %c0_28], %22 {strides = array<i32>} : memref<16x1xf32, #tpu.memory_space<vmem>>, vector<16x1xf32>,
    %c0_29 = arith.constant 0 : index
    %c0_30 = arith.constant 0 : index
    %c0_31 = arith.constant 0 : index
    %49 = vector.load %arg7[%c0_29, %c0_30, %c0_31] : memref<1x16x1xf32, #tpu.memory_space<vmem>>, vector<1x16x1xf32>
    %50 = vector.shape_cast %49 : vector<1x16x1xf32> to vector<16x1xf32>
    %cst_32 = arith.constant dense<0xFF800000> : vector<16xf32>
    %51 = vector.multi_reduction <maximumf>, %18, %cst_32 [1] : vector<16x128xf32> to vector<16xf32>
    %52 = vector.shape_cast %51 : vector<16xf32> to vector<16x1xf32>
    %53 = arith.maximumf %50, %52 : vector<16x1xf32>
    %54 = arith.subf %50, %53 : vector<16x1xf32>
    %55 = math.exp %54 : vector<16x1xf32>
    %c0_33 = arith.constant 0 : index
    %c0_34 = arith.constant 0 : index
    %c0_35 = arith.constant 0 : index
    %56 = vector.load %arg8[%c0_33, %c0_34, %c0_35] : memref<1x16x1xf32, #tpu.memory_space<vmem>>, vector<1x16x1xf32>
    %57 = vector.shape_cast %56 : vector<1x16x1xf32> to vector<16x1xf32>
    %58 = arith.mulf %55, %57 : vector<16x1xf32>
    %59 = vector.broadcast %53 : vector<16x1xf32> to vector<16x128xf32>
    %60 = arith.subf %18, %59 : vector<16x128xf32>
    %61 = math.exp %60 : vector<16x128xf32>
    %cst_36 = arith.constant dense<0.000000e+00> : vector<16xf32>
    %62 = vector.multi_reduction <add>, %61, %cst_36 [1] : vector<16x128xf32> to vector<16xf32>
    %63 = vector.shape_cast %62 : vector<16xf32> to vector<16x1xf32>
    %64 = arith.addf %58, %63 : vector<16x1xf32>
    %c0_37 = arith.constant 0 : index
    %c0_38 = arith.constant 0 : index
    %c0_39 = arith.constant 0 : index
    %65 = vector.load %arg8[%c0_37, %c0_38, %c0_39] : memref<1x16x1xf32, #tpu.memory_space<vmem>>, vector<1x16x1xf32>
    %66 = vector.shape_cast %65 : vector<1x16x1xf32> to vector<16x1xf32>
    %67 = vector.shape_cast %64 : vector<16x1xf32> to vector<1x16x1xf32>
    tpu.vector_store %arg8[%c0_37, %c0_38, %c0_39], %67 {strides = array<i32>} : memref<1x16x1xf32, #tpu.memory_space<vmem>>, vector<1x16x1xf32>,
    %c0_40 = arith.constant 0 : index
    %c0_41 = arith.constant 0 : index
    %c0_42 = arith.constant 0 : index
    %68 = vector.load %arg7[%c0_40, %c0_41, %c0_42] : memref<1x16x1xf32, #tpu.memory_space<vmem>>, vector<1x16x1xf32>
    %69 = vector.shape_cast %68 : vector<1x16x1xf32> to vector<16x1xf32>
    %70 = vector.shape_cast %53 : vector<16x1xf32> to vector<1x16x1xf32>
    tpu.vector_store %arg7[%c0_40, %c0_41, %c0_42], %70 {strides = array<i32>} : memref<1x16x1xf32, #tpu.memory_space<vmem>>, vector<1x16x1xf32>,
    return
  }
  func.func @transform_0(%arg0: i32, %arg1: i32) -> (i32, i32, i32) {
    %c0_i32 = arith.constant 0 : i32
    %c0_i32_0 = arith.constant 0 : i32
    return %arg0, %c0_i32, %arg1 : i32, i32, i32
  }
  func.func @transform_1(%arg0: i32, %arg1: i32) -> (i32, i32) {
    %c0_i32 = arith.constant 0 : i32
    %c0_i32_0 = arith.constant 0 : i32
    %c0_i32_1 = arith.constant 0 : i32
    return %c0_i32, %c0_i32_0 : i32, i32
  }
  func.func @transform_2(%arg0: i32, %arg1: i32) -> (i32, i32) {
    %c0_i32 = arith.constant 0 : i32
    %c0_i32_0 = arith.constant 0 : i32
    %c0_i32_1 = arith.constant 0 : i32
    return %c0_i32, %c0_i32_0 : i32, i32
  }
  func.func @transform_3(%arg0: i32, %arg1: i32) -> (i32, i32, i32) {
    %c0_i32 = arith.constant 0 : i32
    %c0_i32_0 = arith.constant 0 : i32
    %c0_i32_1 = arith.constant 0 : i32
    return %arg0, %c0_i32, %c0_i32_0 : i32, i32, i32
  }
  func.func @transform_4(%arg0: i32, %arg1: i32) -> (i32, i32, i32) {
    %c0_i32 = arith.constant 0 : i32
    %c0_i32_0 = arith.constant 0 : i32
    %c0_i32_1 = arith.constant 0 : i32
    return %arg0, %c0_i32, %c0_i32_0 : i32, i32, i32
  }
  func.func @transform_5(%arg0: i32, %arg1: i32) -> (i32, i32, i32) {
    %c0_i32 = arith.constant 0 : i32
    %c0_i32_0 = arith.constant 0 : i32
    %c0_i32_1 = arith.constant 0 : i32
    return %arg0, %c0_i32, %c0_i32_0 : i32, i32, i32
  }
  func.func @transform_6(%arg0: i32, %arg1: i32) -> (i32, i32, i32) {
    %c0_i32 = arith.constant 0 : i32
    %c0_i32_0 = arith.constant 0 : i32
    %c0_i32_1 = arith.constant 0 : i32
    return %arg0, %c0_i32, %c0_i32_0 : i32, i32, i32
  }
  func.func @transform_7(%arg0: i32, %arg1: i32) -> (i32, i32, i32) {
    %c0_i32 = arith.constant 0 : i32
    %c0_i32_0 = arith.constant 0 : i32
    return %arg0, %c0_i32, %arg1 : i32, i32, i32
  }
}

</mosaic_0001>

<llo_original>
// kernel: tpu_custom_call.1
$region0: #{tpu_custom_call.1}
  #allocation0 [shape = 'u32[]', space=smem, size = 0x4, offset = 0x4, fixed_abs, tag = 'smem constant byte address 0x4 - core index']
  #allocation1 [shape = 'u32[144,128]{1,0:T(1,128)}', space=vmem, size = 0x12000, scoped, tag = 'internal scratch']
  #allocation2 [shape = 'f32[16,1]{1,0:T(8,128)}', space=vmem, size = 0x2000, scoped, tag = 'scratch operand']
  %s0 = inlined_call_operand.hbm [shape: f32[2,32,512], index: 0, kind: input, shape index: {}]
  %s1 = inlined_call_operand.vmem [shape: bf16[64,32], index: 1, kind: input, shape index: {}]
  %s2 = inlined_call_operand.vmem [shape: f32[64,1], index: 2, kind: input, shape index: {}]
  %s3 = inlined_call_operand.hbm [shape: f32[2,16,32], index: 3, kind: output, shape index: {0}]
  %s4 = inlined_call_operand.vmem [shape: f32[2,16,1], index: 4, kind: output, shape index: {1}]
  %s5 = inlined_call_operand.vmem [shape: f32[2,16,1], index: 5, kind: output, shape index: {2}]
  %s6 = inlined_call_operand.vmem [shape: f32[2,16,1], index: 6, kind: output, shape index: {3}]
  %s7 = inlined_call_operand.hbm [shape: bf16[2,16,512], index: 7, kind: output, shape index: {4}]
  %8 = xla_tuple %s3, %s4, %s5, %s6, %s7
  %s9 = sld [smem:[#allocation0]]
  $region85: #{tpu_custom_call.1} parent=0
    _
  %s11 = ssub.s32 1, %s9
  %s12 = scalar_select 0, %s11, %s9
  $region1: #{tpu_custom_call.1} parent=0
    #allocation3 [shape = 'u8[32768]{0}', space=vmem, size = 0x8000, scoped, tag = 'input window, operand 0']
    #allocation4 [shape = 's32[2]{0}', space=sflag, size = 0x8, scoped, tag = 'scoped memory for tpu_custom_call.1']
    #allocation5 [shape = 's32[2]{0}', space=sflag, size = 0x8, scoped, tag = 'scoped memory for tpu_custom_call.1']
    #allocation6 [shape = 'u8[16384]{0}', space=vmem, size = 0x4000, scoped, tag = 'output window, operand 0']
    #allocation7 [shape = 'u8[8192]{0}', space=vmem, size = 0x2000, scoped, tag = 'output window, operand 4']
    #allocation8 [shape = 's32[2]{0}', space=sflag, size = 0x8, scoped, tag = 'scoped memory for tpu_custom_call.1']
    %13 = vsyncpa [#allocation4], 0
    %s14 = scalar_lea.sflag [#allocation4], 1
    %15 = vsyncpa %s14, 0
    %16 = vsyncpa [#allocation5], 0
    %s17 = scalar_lea.sflag [#allocation5], 1
    %18 = vsyncpa %s17, 0
    %19 = vsyncpa [#allocation8], 0
    %s20 = scalar_lea.sflag [#allocation8], 1
    %21 = vsyncpa %s20, 0
    loop: start=0, step=1, limit=10
    $region2: #{tpu_custom_call.1} parent=1 // loop_pre_header
      _
    $region3: #{tpu_custom_call.1} parent=1 // loop_header
      %s23 = sphi 0, %s27
      %p24 = scmp.ge.s32.totalorder %s23, 10
      %s30 = sphi 0, %s42
      %s31 = sphi 0, %s38
      %s32 = sphi 0, %s30
      %s33 = sphi 0, %s31
      %s34 = sphi 0, %s32
      %s35 = sphi 0, %s33
      %s47 = sphi 0, %s49
      %s50 = sphi 0, %s47
      %s51 = sphi 0, %s50
      %s67 = sphi 0, %s51
      %s71 = sphi 0, %s71
      %s73 = sphi 0, %s71
      %s74 = sphi 0, %s73
      %s88 = sphi 0, %s74
      %s92 = sphi 0, %s92
      %s94 = sphi 0, %s92
      %s95 = sphi 0, %s94
      %s109 = sphi 0, %s95
      %s115 = sphi 0, %s117
      %s118 = sphi 0, %s115
      %s119 = sphi 0, %s118
      %s135 = sphi 0, %s119
      %s141 = sphi 0, %s143
      %s144 = sphi 0, %s141
      %s145 = sphi 0, %s144
      %s161 = sphi 0, %s145
      %s167 = sphi 0, %s169
      %s170 = sphi 0, %s167
      %s171 = sphi 0, %s170
      %s187 = sphi 0, %s171
      %s193 = sphi 0, %s195
      %s196 = sphi 0, %s193
      %s197 = sphi 0, %s196
      %s213 = sphi 0, %s197
      %s221 = sphi 0, %s223
      %s224 = sphi 0, %s221
      %s225 = sphi 0, %s224
      %s241 = sphi 0, %s225
    $region4: #{tpu_custom_call.1} parent=1 // loop_header_branch
      %26 = sbr.rel (%p24) target = $region8
    $region5: #{tpu_custom_call.1} parent=1 // loop_body
      %s28 = ssub.s32 %s23, 1
      %s29 = ssub.s32 %s23, 2
      %s36 = sadd.s32 1, %s31
      %p37 = scmp.ge.s32.totalorder %s36, 4
      %s38 = scalar_select %p37, 0, %s36
      %s39 = sadd.s32 1, %s30
      %s40 = scalar_select %p37, %s39, %s30
      %p41 = scmp.ge.s32.totalorder %s40, 2
      %s42 = scalar_select %p41, 0, %s40
      %s43 = ssub.s32 %s30, %s42
      %s44 = ssub.s32 %s31, %s38
      %s45 = sor.u32 %s43, %s44
      %p46 = scmp.eq.s32.totalorder %s45, 0
      %s48 = sadd.s32 %s47, 1
      %s49 = scalar_select %p46, %s47, %s48
      %p52 = pneg %p46
      %p53 = scmp.eq.s32.totalorder %s23, 7
      %p54 = por %p52, %p53
      %p55 = scmp.ne.s32.totalorder %s47, %s50
      %p56 = scmp.eq.s32.totalorder %s23, 0
      %p57 = por %p55, %p56
      %p58 = scmp.ne.s32.totalorder %s47, %s50
      %p59 = scmp.eq.s32.totalorder %s28, 7
      %p60 = por %p58, %p59
      %p61 = scmp.ne.s32.totalorder %s50, %s51
      %p62 = scmp.eq.s32.totalorder %s28, 0
      %p63 = por %p61, %p62
      %p64 = scmp.ne.s32.totalorder %s50, %s51
      %p65 = scmp.eq.s32.totalorder %s29, 7
      %p66 = por %p64, %p65
      %p68 = scmp.ne.s32.totalorder %s51, %s67
      %p69 = scmp.eq.s32.totalorder %s29, 0
      %p70 = por %p68, %p69
      %s72 = sadd.s32 %s71, 1
      %p75 = scmp.eq.s32.totalorder %s23, 7
      %p76 = scmp.ne.s32.totalorder %s71, %s73
      %p77 = scmp.eq.s32.totalorder %s23, 0
      %p78 = por %p76, %p77
      %p79 = scmp.ne.s32.totalorder %s71, %s73
      %p80 = scmp.eq.s32.totalorder %s28, 7
      %p81 = por %p79, %p80
      %p82 = scmp.ne.s32.totalorder %s73, %s74
      %p83 = scmp.eq.s32.totalorder %s28, 0
      %p84 = por %p82, %p83
      %p85 = scmp.ne.s32.totalorder %s73, %s74
      %p86 = scmp.eq.s32.totalorder %s29, 7
      %p87 = por %p85, %p86
      %p89 = scmp.ne.s32.totalorder %s74, %s88
      %p90 = scmp.eq.s32.totalorder %s29, 0
      %p91 = por %p89, %p90
      %s93 = sadd.s32 %s92, 1
      %p96 = scmp.eq.s32.totalorder %s23, 7
      %p97 = scmp.ne.s32.totalorder %s92, %s94
      %p98 = scmp.eq.s32.totalorder %s23, 0
      %p99 = por %p97, %p98
      %p100 = scmp.ne.s32.totalorder %s92, %s94
      %p101 = scmp.eq.s32.totalorder %s28, 7
      %p102 = por %p100, %p101
      %p103 = scmp.ne.s32.totalorder %s94, %s95
      %p104 = scmp.eq.s32.totalorder %s28, 0
      %p105 = por %p103, %p104
      %p106 = scmp.ne.s32.totalorder %s94, %s95
      %p107 = scmp.eq.s32.totalorder %s29, 7
      %p108 = por %p106, %p107
      %p110 = scmp.ne.s32.totalorder %s95, %s109
      %p111 = scmp.eq.s32.totalorder %s29, 0
      %p112 = por %p110, %p111
      %s113 = ssub.s32 %s30, %s42
      %p114 = scmp.eq.s32.totalorder %s113, 0
      %s116 = sadd.s32 %s115, 1
      %s117 = scalar_select %p114, %s115, %s116
      %p120 = pneg %p114
      %p121 = scmp.eq.s32.totalorder %s23, 7
      %p122 = por %p120, %p121
      %p123 = scmp.ne.s32.totalorder %s115, %s118
      %p124 = scmp.eq.s32.totalorder %s23, 0
      %p125 = por %p123, %p124
      %p126 = scmp.ne.s32.totalorder %s115, %s118
      %p127 = scmp.eq.s32.totalorder %s28, 7
      %p128 = por %p126, %p127
      %p129 = scmp.ne.s32.totalorder %s118, %s119
      %p130 = scmp.eq.s32.totalorder %s28, 0
      %p131 = por %p129, %p130
      %p132 = scmp.ne.s32.totalorder %s118, %s119
      %p133 = scmp.eq.s32.totalorder %s29, 7
      %p134 = por %p132, %p133
      %p136 = scmp.ne.s32.totalorder %s119, %s135
      %p137 = scmp.eq.s32.totalorder %s29, 0
      %p138 = por %p136, %p137
      %s139 = ssub.s32 %s30, %s42
      %p140 = scmp.eq.s32.totalorder %s139, 0
      %s142 = sadd.s32 %s141, 1
      %s143 = scalar_select %p140, %s141, %s142
      %p146 = pneg %p140
      %p147 = scmp.eq.s32.totalorder %s23, 7
      %p148 = por %p146, %p147
      %p149 = scmp.ne.s32.totalorder %s141, %s144
      %p150 = scmp.eq.s32.totalorder %s23, 0
      %p151 = por %p149, %p150
      %p152 = scmp.ne.s32.totalorder %s141, %s144
      %p153 = scmp.eq.s32.totalorder %s28, 7
      %p154 = por %p152, %p153
      %p155 = scmp.ne.s32.totalorder %s144, %s145
      %p156 = scmp.eq.s32.totalorder %s28, 0
      %p157 = por %p155, %p156
      %p158 = scmp.ne.s32.totalorder %s144, %s145
      %p159 = scmp.eq.s32.totalorder %s29, 7
      %p160 = por %p158, %p159
      %p162 = scmp.ne.s32.totalorder %s145, %s161
      %p163 = scmp.eq.s32.totalorder %s29, 0
      %p164 = por %p162, %p163
      %s165 = ssub.s32 %s30, %s42
      %p166 = scmp.eq.s32.totalorder %s165, 0
      %s168 = sadd.s32 %s167, 1
      %s169 = scalar_select %p166, %s167, %s168
      %p172 = pneg %p166
      %p173 = scmp.eq.s32.totalorder %s23, 7
      %p174 = por %p172, %p173
      %p175 = scmp.ne.s32.totalorder %s167, %s170
      %p176 = scmp.eq.s32.totalorder %s23, 0
      %p177 = por %p175, %p176
      %p178 = scmp.ne.s32.totalorder %s167, %s170
      %p179 = scmp.eq.s32.totalorder %s28, 7
      %p180 = por %p178, %p179
      %p181 = scmp.ne.s32.totalorder %s170, %s171
      %p182 = scmp.eq.s32.totalorder %s28, 0
      %p183 = por %p181, %p182
      %p184 = scmp.ne.s32.totalorder %s170, %s171
      %p185 = scmp.eq.s32.totalorder %s29, 7
      %p186 = por %p184, %p185
      %p188 = scmp.ne.s32.totalorder %s171, %s187
      %p189 = scmp.eq.s32.totalorder %s29, 0
      %p190 = por %p188, %p189
      %s191 = ssub.s32 %s30, %s42
      %p192 = scmp.eq.s32.totalorder %s191, 0
      %s194 = sadd.s32 %s193, 1
      %s195 = scalar_select %p192, %s193, %s194
      %p198 = pneg %p192
      %p199 = scmp.eq.s32.totalorder %s23, 7
      %p200 = por %p198, %p199
      %p201 = scmp.ne.s32.totalorder %s193, %s196
      %p202 = scmp.eq.s32.totalorder %s23, 0
      %p203 = por %p201, %p202
      %p204 = scmp.ne.s32.totalorder %s193, %s196
      %p205 = scmp.eq.s32.totalorder %s28, 7
      %p206 = por %p204, %p205
      %p207 = scmp.ne.s32.totalorder %s196, %s197
      %p208 = scmp.eq.s32.totalorder %s28, 0
      %p209 = por %p207, %p208
      %p210 = scmp.ne.s32.totalorder %s196, %s197
      %p211 = scmp.eq.s32.totalorder %s29, 7
      %p212 = por %p210, %p211
      %p214 = scmp.ne.s32.totalorder %s197, %s213
      %p215 = scmp.eq.s32.totalorder %s29, 0
      %p216 = por %p214, %p215
      %s217 = ssub.s32 %s30, %s42
      %s218 = ssub.s32 %s31, %s38
      %s219 = sor.u32 %s217, %s218
      %p220 = scmp.eq.s32.totalorder %s219, 0
      %s222 = sadd.s32 %s221, 1
      %s223 = scalar_select %p220, %s221, %s222
      %p226 = pneg %p220
      %p227 = scmp.eq.s32.totalorder %s23, 7
      %p228 = por %p226, %p227
      %p229 = scmp.ne.s32.totalorder %s221, %s224
      %p230 = scmp.eq.s32.totalorder %s23, 0
      %p231 = por %p229, %p230
      %p232 = scmp.ne.s32.totalorder %s221, %s224
      %p233 = scmp.eq.s32.totalorder %s28, 7
      %p234 = por %p232, %p233
      %p235 = scmp.ne.s32.totalorder %s224, %s225
      %p236 = scmp.eq.s32.totalorder %s28, 0
      %p237 = por %p235, %p236
      %p238 = scmp.ne.s32.totalorder %s224, %s225
      %p239 = scmp.eq.s32.totalorder %s29, 7
      %p240 = por %p238, %p239
      %p242 = scmp.ne.s32.totalorder %s225, %s241
      %p243 = scmp.eq.s32.totalorder %s29, 0
      %p244 = por %p242, %p243
      %p245 = scmp.le.s32.totalorder 1, %s23
      %p246 = scmp.lt.s32.totalorder %s23, 9
      %p247 = pnand %p245, %p246
      %p248 = pneg %p247
      // Predicated region
      $region9: #{tpu_custom_call.1} parent=5 // pred_check
        _
      $region10: #{tpu_custom_call.1} parent=5 // pred_check_branch
        %250 = sbr.rel (%p247) target = $region12
      $region11: #{tpu_custom_call.1} parent=5 // pred_region
        %s251 = ssub.s32 %s23, 1
        // Predicated region
        $region13: #{tpu_custom_call.1} parent=11 // pred_check
          %p252 = pneg %p84
        $region14: #{tpu_custom_call.1} parent=11 // pred_check_branch
          %254 = sbr.rel (%p252) target = $region16
        $region15: #{tpu_custom_call.1} parent=11 // pred_region
          _
        $region16: #{tpu_custom_call.1} parent=11 // pred_fallthru
          _
        // Predicated region
        $region17: #{tpu_custom_call.1} parent=11 // pred_check
          %p255 = pneg %p105
        $region18: #{tpu_custom_call.1} parent=11 // pred_check_branch
          %257 = sbr.rel (%p255) target = $region20
        $region19: #{tpu_custom_call.1} parent=11 // pred_region
          _
        $region20: #{tpu_custom_call.1} parent=11 // pred_fallthru
          _
      $region12: #{tpu_custom_call.1} parent=5 // pred_fallthru
        _
      %p258 = scmp.lt.s32.totalorder %s23, 8
      // Predicated region
      $region21: #{tpu_custom_call.1} parent=5 // pred_check
        %p259 = pneg %p258
      $region22: #{tpu_custom_call.1} parent=5 // pred_check_branch
        %261 = sbr.rel (%p259) target = $region24
      $region23: #{tpu_custom_call.1} parent=5 // pred_region
        // Predicated region
        $region25: #{tpu_custom_call.1} parent=23 // pred_check
          %p262 = pneg %p57
        $region26: #{tpu_custom_call.1} parent=23 // pred_check_branch
          %264 = sbr.rel (%p262) target = $region28
        $region27: #{tpu_custom_call.1} parent=23 // pred_region
          %s265 = sand.u32 %s47, 1
          %s266 = scalar_lea.sflag [#allocation4], %s265
          %s267 = sand.u32 %s47, 1
          %s268 = smul.addr %s267, 32
          %s269 = scalar_lea.vmem [#allocation3], %s268
          %s271 = ssub.s32 512, 512
          %272 = vsyncadd %s266, %s271
          %s273 = smul.addr %s30, 16
          %s274 = sadd.s32 %s31, %s273
          %s275 = smul.addr %s274, 128
          %s276 = scalar_lea.hbm %s0, %s275
          %s277 = sshll.u32 %s269, 4
          %s278 = int_to_ptr.vmem [resolvable:$true] %s277
          %283 = dma.hbm_to_vmem [thread:$0]  %s276, 512, %s278, %s266, 512, 128, 8
        $region28: #{tpu_custom_call.1} parent=23 // pred_fallthru
          _
      $region24: #{tpu_custom_call.1} parent=5 // pred_fallthru
        _
      %p284 = scmp.le.s32.totalorder 1, %s23
      %p285 = scmp.lt.s32.totalorder %s23, 9
      %p286 = pnand %p284, %p285
      %p287 = pneg %p286
      // Predicated region
      $region29: #{tpu_custom_call.1} parent=5 // pred_check
        _
      $region30: #{tpu_custom_call.1} parent=5 // pred_check_branch
        %289 = sbr.rel (%p286) target = $region32
      $region31: #{tpu_custom_call.1} parent=5 // pred_region
        %s290 = ssub.s32 %s23, 1
        %s291 = sand.u32 %s50, 1
        %s292 = scalar_lea.sflag [#allocation4], %s291
        %s293 = sand.u32 %s50, 1
        %s294 = smul.addr %s293, 32
        %s295 = scalar_lea.vmem [#allocation3], %s294
        // Predicated region
        $region33: #{tpu_custom_call.1} parent=31 // pred_check
          %p296 = pneg %p63
        $region34: #{tpu_custom_call.1} parent=31 // pred_check_branch
          %298 = sbr.rel (%p296) target = $region36
        $region35: #{tpu_custom_call.1} parent=31 // pred_region
          %299 = dma.done %s292, 512
        $region36: #{tpu_custom_call.1} parent=31 // pred_fallthru
          _
        %s300 = sand.u32 %s50, 1
        %s301 = scalar_lea.sflag [#allocation4], %s300
        %s302 = sand.u32 %s50, 1
        %s303 = smul.addr %s302, 32
        %s304 = scalar_lea.vmem [#allocation3], %s303
        %p305 = pneg %p63
        %p306 = pneg %p60
        %p307 = pneg %p84
        %p308 = pneg %p81
        %p309 = pneg %p105
        %p310 = pneg %p102
        %p311 = pneg %p131
        %p312 = pneg %p128
        %s313 = sand.u32 %s118, 1
        %s314 = scalar_lea.sflag [#allocation5], %s313
        %s315 = sand.u32 %s118, 1
        %s316 = smul.addr %s315, 16
        %s317 = scalar_lea.vmem [#allocation6], %s316
        %p318 = pneg %p157
        %p319 = pneg %p154
        %p320 = scmp.lt.s32.totalorder %s32, 1
        %s321 = scalar_select %p320, %s32, 1
        %s322 = smul.addr %s321, 2
        %s323 = smul.addr %s322, 8
        %s324 = scalar_lea.vmem %s4, %s323
        %p325 = pneg %p183
        %p326 = pneg %p180
        %p327 = scmp.lt.s32.totalorder %s32, 1
        %s328 = scalar_select %p327, %s32, 1
        %s329 = smul.addr %s328, 2
        %s330 = smul.addr %s329, 8
        %s331 = scalar_lea.vmem %s5, %s330
        %p332 = pneg %p209
        %p333 = pneg %p206
        %p334 = scmp.lt.s32.totalorder %s32, 1
        %s335 = scalar_select %p334, %s32, 1
        %s336 = smul.addr %s335, 2
        %s337 = smul.addr %s336, 8
        %s338 = scalar_lea.vmem %s6, %s337
        %p339 = pneg %p237
        %p340 = pneg %p234
        %s341 = sand.u32 %s224, 1
        %s342 = scalar_lea.sflag [#allocation8], %s341
        %s343 = sand.u32 %s224, 1
        %s344 = smul.addr %s343, 8
        %s345 = scalar_lea.vmem [#allocation7], %s344
        %p346 = scmp.lt.s32.totalorder %s32, 1
        %s347 = scalar_select %p346, %s32, 1
        %s348 = smul.addr %s347, 2
        %s349 = smul.addr %s348, 8
        %s350 = scalar_lea.vmem %s4, %s349
        %p351 = scmp.lt.s32.totalorder %s32, 1
        %s352 = scalar_select %p351, %s32, 1
        %s353 = smul.addr %s352, 2
        %s354 = smul.addr %s353, 8
        %s355 = scalar_lea.vmem %s5, %s354
        %p356 = scmp.lt.s32.totalorder %s32, 1
        %s357 = scalar_select %p356, %s32, 1
        %s358 = smul.addr %s357, 2
        %s359 = smul.addr %s358, 8
        %s360 = scalar_lea.vmem %s6, %s359
        %p362 = scmp.eq.s32.totalorder %s33, 0
        // Predicated region
        $region37: #{tpu_custom_call.1} parent=31 // pred_check
          %p363 = pneg %p362
        $region38: #{tpu_custom_call.1} parent=31 // pred_check_branch
          %365 = sbr.rel (%p363) target = $region40
        $region39: #{tpu_custom_call.1} parent=31 // pred_region
          %vm366 = vcmask 261120
          %367 = vst.msk [vmem:[%s317] sm:$0xff] %vm366, 0.0
          %368 = vst.msk [vmem:[%s317 + $0x8] sm:$0xff] %vm366, 0.0
          %vm369 = vcmask 7168
          %370 = vst.msk [vmem:[%s350] sm:$0xff] %vm369, 0.0
          %371 = vst.msk [vmem:[%s350 + $0x8] sm:$0xff] %vm369, 0.0
          %372 = vst.msk [vmem:[%s360] sm:$0xff] %vm369, 0.0
          %373 = vst.msk [vmem:[%s360 + $0x8] sm:$0xff] %vm369, 0.0
          %374 = vst.msk [vmem:[%s355] sm:$0xff] %vm369, -inf
          %375 = vst.msk [vmem:[%s355 + $0x8] sm:$0xff] %vm369, -inf
          %376 = vst.msk [vmem:[#allocation2] sm:$0xff] %vm369, -inf
          %377 = vst.msk [vmem:[#allocation2 + $0x8] sm:$0xff] %vm369, -inf
        $region40: #{tpu_custom_call.1} parent=31 // pred_fallthru
          _
        %v378 = vld [vmem:[%s295] sm:$0xff]
        %v379 = vld [vmem:[%s295 + $0x8] sm:$0xff]
        %v380 = vld [vmem:[%s295 + $0x10] sm:$0xff]
        %v381 = vld [vmem:[%s295 + $0x18] sm:$0xff]
        %v382 = vpack.c.bf16 %v379, %v378
        %v383 = vpack.c.bf16 %v381, %v380
        %v384 = vld [vmem:[%s1] sm:$0xf]
        %v385 = vld [vmem:[%s1 + $0x4] sm:$0xf]
        %v386 = vld [vmem:[%s1 + $0x8] sm:$0xf]
        %v387 = vld [vmem:[%s1 + $0xc] sm:$0xf]
        %v388 = vld [vmem:[%s1 + $0x10] sm:$0xf]
        %v389 = vld [vmem:[%s1 + $0x14] sm:$0xf]
        %v390 = vld [vmem:[%s1 + $0x18] sm:$0xf]
        %v391 = vld [vmem:[%s1 + $0x1c] sm:$0xf]
        %v392 = vld [vmem:[%s2] sm:$0xff]
        %v393 = vld [vmem:[%s2 + $0x8] sm:$0xff]
        %v394 = vld [vmem:[%s2 + $0x10] sm:$0xff]
        %v395 = vld [vmem:[%s2 + $0x18] sm:$0xff]
        %v396 = vld [vmem:[%s2 + $0x20] sm:$0xff]
        %v397 = vld [vmem:[%s2 + $0x28] sm:$0xff]
        %v398 = vld [vmem:[%s2 + $0x30] sm:$0xff]
        %v399 = vld [vmem:[%s2 + $0x38] sm:$0xff]
        %401 = vset.pattern.permute.xlu0 0
        %402 = vperm.xlu0 %401, %v392
        %v403 = vpop.permute.xlu0 %402
        %406 = vset.pattern.permute.xlu0 0
        %407 = vperm.xlu0 %406, %v393
        %v408 = vpop.permute.xlu0 %407
        %411 = vset.pattern.permute.xlu0 0
        %412 = vperm.xlu0 %411, %v394
        %v413 = vpop.permute.xlu0 %412
        %416 = vset.pattern.permute.xlu0 0
        %417 = vperm.xlu0 %416, %v395
        %v418 = vpop.permute.xlu0 %417
        %421 = vset.pattern.permute.xlu0 0
        %422 = vperm.xlu0 %421, %v396
        %v423 = vpop.permute.xlu0 %422
        %426 = vset.pattern.permute.xlu0 0
        %427 = vperm.xlu0 %426, %v397
        %v428 = vpop.permute.xlu0 %427
        %431 = vset.pattern.permute.xlu0 0
        %432 = vperm.xlu0 %431, %v398
        %v433 = vpop.permute.xlu0 %432
        %436 = vset.pattern.permute.xlu0 0
        %437 = vperm.xlu0 %436, %v399
        %v438 = vpop.permute.xlu0 %437
        %v448 = vunpack.c.l.b16 %v384
        %v449 = vunpack.c.l.b16 %v385
        %v450 = vunpack.c.l.b16 %v386
        %v451 = vunpack.c.l.b16 %v387
        %v452 = vunpack.c.l.b16 %v388
        %v453 = vunpack.c.l.b16 %v389
        %v454 = vunpack.c.l.b16 %v390
        %v455 = vunpack.c.l.b16 %v391
        %v456 = vpack.c.b16 %v449, %v448
        %v457 = vpack.c.b16 %v451, %v450
        %v458 = vpack.c.b16 %v453, %v452
        %v459 = vpack.c.b16 %v455, %v454
        %vm460 = vcmask 261120
        %v462 = vsel %vm460, %v456, 0
        %v465 = vsel %vm460, %v457, 0
        %v468 = vsel %vm460, %v458, 0
        %v471 = vsel %vm460, %v459, 0
        %473 = vmatprep.subr.bf16.mxu0 0
        %474 = vmatpush1.bf16.msra.mxu0 0
        %475 = vmatprep.subr.bf16.mxu0 0
        %476 = vmatpush1.bf16.msra.mxu0 0
        %477 = vmatprep.subr.bf16.mxu0 0
        %478 = vmatpush1.bf16.msra.mxu0 0
        %479 = vmatprep.subr.bf16.mxu0 0
        %480 = vmatpush1.bf16.msra.mxu0 0
        %481 = vmatprep.subr.bf16.mxu0 0
        %482 = vmatpush1.bf16.msra.mxu0 0
        %483 = vmatprep.subr.bf16.mxu0 0
        %484 = vmatpush1.bf16.msra.mxu0 0
        %485 = vmatprep.subr.bf16.mxu0 0
        %486 = vmatpush1.bf16.msra.mxu0 %v383
        %487 = vmatprep.subr.bf16.mxu0 0
        %488 = vmatpush1.bf16.msra.mxu0 %v382
        %489 = vmatprep.subr.bf16.mxu0 0
        %490 = vmatpush2.bf16.msra.mxu0 0
        %491 = vmatprep.subr.bf16.mxu0 0
        %492 = vmatpush2.bf16.msra.mxu0 0
        %493 = vmatprep.subr.bf16.mxu0 0
        %494 = vmatpush2.bf16.msra.mxu0 0
        %495 = vmatprep.subr.bf16.mxu0 0
        %496 = vmatpush2.bf16.msra.mxu0 0
        %497 = vmatprep.subr.bf16.mxu0 0
        %498 = vmatpush2.bf16.msra.mxu0 0
        %499 = vmatprep.subr.bf16.mxu0 0
        %500 = vmatpush2.bf16.msra.mxu0 0
        %501 = vmatprep.subr.bf16.mxu0 0
        %502 = vmatpush2.bf16.msra.mxu0 0
        %503 = vmatprep.subr.bf16.mxu0 0
        %504 = vmatpush2.bf16.msra.mxu0 0
        %505 = vmatprep.mubr.bf16.mxu0 0
        %506 = vmatmul.mubr.bf16.gmra.mxu0 %v462
        %v507 = vpop.f32.mrf.mxu0
        %v508 = vadd.f32 %v403, %v507
        %v509 = vpop.f32.mrf.mxu0
        %v510 = vpop.f32.mrf.mxu0
        %v511 = vadd.f32 %v408, %v510
        %v512 = vpop.f32.mrf.mxu0
        %513 = vmatprep.mubr.bf16.mxu0 0
        %514 = vmatmul.mubr.bf16.gmra.mxu0 %v465
        %v515 = vpop.f32.mrf.mxu0
        %v516 = vadd.f32 %v413, %v515
        %v517 = vpop.f32.mrf.mxu0
        %v518 = vpop.f32.mrf.mxu0
        %v519 = vadd.f32 %v418, %v518
        %v520 = vpop.f32.mrf.mxu0
        %521 = vmatprep.mubr.bf16.mxu0 0
        %522 = vmatmul.mubr.bf16.gmra.mxu0 %v468
        %v523 = vpop.f32.mrf.mxu0
        %v524 = vadd.f32 %v423, %v523
        %v525 = vpop.f32.mrf.mxu0
        %v526 = vpop.f32.mrf.mxu0
        %v527 = vadd.f32 %v428, %v526
        %v528 = vpop.f32.mrf.mxu0
        %529 = vmatprep.mubr.bf16.mxu0 0
        %530 = vmatmul.mubr.bf16.gmra.mxu0 %v471
        %v531 = vpop.f32.mrf.mxu0
        %v532 = vadd.f32 %v433, %v531
        %v533 = vpop.f32.mrf.mxu0
        %v534 = vpop.f32.mrf.mxu0
        %v535 = vadd.f32 %v438, %v534
        %v536 = vpop.f32.mrf.mxu0
        %537 = vdwg.mxu0
        %v538 = vpack.c.bf16 %v535, %v532
        %v540 = vunpack.c.l.b16 %v538
        %v541 = vunpack.c.h.b16 %v538
        %v542 = vpack.c.b16 %v540, %v540
        %v543 = vpack.c.b16 %v541, %v541
        %546 = vst [vmem:[%s345] sm:$0xf] %v542
        %547 = vst [vmem:[%s345 + $0x4] sm:$0xf] %v543
        %v548 = vunpack.c.l.bf16 %v538
        %v549 = vunpack.c.h.bf16 %v538
        %v550 = vld [vmem:[#allocation2] sm:$0xff]
        %v551 = vld [vmem:[#allocation2 + $0x8] sm:$0xff]
        %552 = vmax.xlane.f32.xlu0 %v524
        %v553 = vpop.xlane.xlu0 %552
        %554 = vmax.xlane.f32.xlu0 %v527
        %v555 = vpop.xlane.xlu0 %554
        %v556 = vmax.f32 %v550, %v553
        %v557 = vmax.f32 %v551, %v555
        %v558 = vsub.f32 %v550, %v556
        %v559 = vsub.f32 %v551, %v557
        %v560 = vmul.f32 %v558, 1.442695
        %v561 = vpow.pop %v560
        %v562 = vmul.f32 %v559, 1.442695
        %v563 = vpow.pop %v562
        %565 = vset.pattern.permute.xlu0 0
        %566 = vperm.xlu0 %565, %v556
        %v567 = vpop.permute.xlu0 %566
        %570 = vset.pattern.permute.xlu0 0
        %571 = vperm.xlu0 %570, %v557
        %v572 = vpop.permute.xlu0 %571
        %v574 = vsub.f32 %v524, %v567
        %v575 = vsub.f32 %v527, %v572
        %v576 = vmul.f32 %v574, 1.442695
        %v577 = vpow.pop %v576
        %v578 = vmul.f32 %v575, 1.442695
        %v579 = vpow.pop %v578
        %v580 = vld [vmem:[%s350] sm:$0xff]
        %v581 = vld [vmem:[%s350 + $0x8] sm:$0xff]
        %v582 = vmul.f32 %v561, %v580
        %v583 = vmul.f32 %v563, %v581
        %584 = vadd.xlane.f32.xlu0 %v577
        %v585 = vpop.xlane.xlu0 %584
        %586 = vadd.xlane.f32.xlu0 %v579
        %v587 = vpop.xlane.xlu0 %586
        %v588 = vadd.f32 %v582, %v585
        %v589 = vadd.f32 %v583, %v587
        %vm590 = vcmask 7168
        %591 = vst.msk [vmem:[%s350] sm:$0xff] %vm590, %v588
        %592 = vst.msk [vmem:[%s350 + $0x8] sm:$0xff] %vm590, %v589
        %v593 = vld [vmem:[%s317] sm:$0xff]
        %v594 = vld [vmem:[%s317 + $0x8] sm:$0xff]
        %596 = vset.pattern.permute.xlu0 0
        %597 = vperm.xlu0 %596, %v561
        %v598 = vpop.permute.xlu0 %597
        %601 = vset.pattern.permute.xlu0 0
        %602 = vperm.xlu0 %601, %v563
        %v603 = vpop.permute.xlu0 %602
        %v605 = vmul.f32 %v593, %v598
        %v606 = vmul.f32 %v594, %v603
        %v607 = vpack.c.bf16 %v579, %v577
        %v608 = vpack.c.bf16 %v511, %v508
        %v609 = vpack.c.bf16 %v519, %v516
        %610 = vmatprep.subr.bf16.mxu0 0
        %611 = vmatpush1.bf16.xpose.msra.mxu0 0
        %612 = vmatprep.subr.bf16.mxu0 0
        %613 = vmatpush1.bf16.xpose.msra.mxu0 0
        %614 = vmatprep.subr.bf16.mxu0 0
        %615 = vmatpush1.bf16.xpose.msra.mxu0 0
        %616 = vmatprep.subr.bf16.mxu0 0
        %617 = vmatpush1.bf16.xpose.msra.mxu0 0
        %618 = vmatprep.subr.bf16.mxu0 0
        %619 = vmatpush1.bf16.xpose.msra.mxu0 0
        %620 = vmatprep.subr.bf16.mxu0 0
        %621 = vmatpush1.bf16.xpose.msra.mxu0 0
        %622 = vmatprep.subr.bf16.mxu0 0
        %623 = vmatpush1.bf16.xpose.msra.mxu0 %v609
        %624 = vmatprep.subr.bf16.mxu0 0
        %625 = vmatpush1.bf16.xpose.msra.mxu0 %v608
        %626 = vmatprep.subr.bf16.mxu0 0
        %627 = vmatpush2.bf16.xpose.msra.mxu0 0
        %628 = vmatprep.subr.bf16.mxu0 0
        %629 = vmatpush2.bf16.xpose.msra.mxu0 0
        %630 = vmatprep.subr.bf16.mxu0 0
        %631 = vmatpush2.bf16.xpose.msra.mxu0 0
        %632 = vmatprep.subr.bf16.mxu0 0
        %633 = vmatpush2.bf16.xpose.msra.mxu0 0
        %634 = vmatprep.subr.bf16.mxu0 0
        %635 = vmatpush2.bf16.xpose.msra.mxu0 0
        %636 = vmatprep.subr.bf16.mxu0 0
        %637 = vmatpush2.bf16.xpose.msra.mxu0 0
        %638 = vmatprep.subr.bf16.mxu0 0
        %639 = vmatpush2.bf16.xpose.msra.mxu0 0
        %640 = vmatprep.subr.bf16.mxu0 0
        %641 = vmatpush2.bf16.xpose.msra.mxu0 0
        %642 = vmatprep.mubr.bf16.mxu0 0
        %643 = vmatmul.mubr.bf16.gmra.mxu0 %v607
        %v644 = vpop.f32.mrf.mxu0
        %v645 = vadd.f32 0.0, %v644
        %v646 = vpop.f32.mrf.mxu0
        %v647 = vpop.f32.mrf.mxu0
        %v648 = vadd.f32 0.0, %v647
        %v649 = vpop.f32.mrf.mxu0
        %650 = vdwg.mxu0
        %v651 = vadd.f32 %v605, %v645
        %v652 = vadd.f32 %v606, %v648
        %653 = vst.msk [vmem:[%s317] sm:$0xff] %vm460, %v651
        %654 = vst.msk [vmem:[%s317 + $0x8] sm:$0xff] %vm460, %v652
        %655 = vst.msk [vmem:[#allocation2] sm:$0xff] %vm590, %v556
        %656 = vst.msk [vmem:[#allocation2 + $0x8] sm:$0xff] %vm590, %v557
        %v657 = vld [vmem:[%s355] sm:$0xff]
        %v658 = vld [vmem:[%s355 + $0x8] sm:$0xff]
        %659 = vmax.xlane.f32.xlu0 %v548
        %v660 = vpop.xlane.xlu0 %659
        %661 = vmax.xlane.f32.xlu0 %v549
        %v662 = vpop.xlane.xlu0 %661
        %v663 = vmax.f32 %v657, %v660
        %v664 = vmax.f32 %v658, %v662
        %v665 = vsub.f32 %v657, %v663
        %v666 = vsub.f32 %v658, %v664
        %v667 = vmul.f32 %v665, 1.442695
        %v668 = vpow.pop %v667
        %v669 = vmul.f32 %v666, 1.442695
        %v670 = vpow.pop %v669
        %v671 = vld [vmem:[%s360] sm:$0xff]
        %v672 = vld [vmem:[%s360 + $0x8] sm:$0xff]
        %v673 = vmul.f32 %v668, %v671
        %v674 = vmul.f32 %v670, %v672
        %676 = vset.pattern.permute.xlu0 0
        %677 = vperm.xlu0 %676, %v663
        %v678 = vpop.permute.xlu0 %677
        %681 = vset.pattern.permute.xlu0 0
        %682 = vperm.xlu0 %681, %v664
        %v683 = vpop.permute.xlu0 %682
        %v685 = vsub.f32 %v548, %v678
        %v686 = vsub.f32 %v549, %v683
        %v687 = vmul.f32 %v685, 1.442695
        %v688 = vpow.pop %v687
        %v689 = vmul.f32 %v686, 1.442695
        %v690 = vpow.pop %v689
        %691 = vadd.xlane.f32.xlu0 %v688
        %v692 = vpop.xlane.xlu0 %691
        %693 = vadd.xlane.f32.xlu0 %v690
        %v694 = vpop.xlane.xlu0 %693
        %v695 = vadd.f32 %v673, %v692
        %v696 = vadd.f32 %v674, %v694
        %697 = vst.msk [vmem:[%s360] sm:$0xff] %vm590, %v695
        %698 = vst.msk [vmem:[%s360 + $0x8] sm:$0xff] %vm590, %v696
        %699 = vst.msk [vmem:[%s355] sm:$0xff] %vm590, %v663
        %700 = vst.msk [vmem:[%s355 + $0x8] sm:$0xff] %vm590, %v664
        %s701 = sand.u32 %s118, 1
        %s702 = scalar_lea.sflag [#allocation5], %s701
        %s703 = sand.u32 %s118, 1
        %s704 = smul.addr %s703, 16
        %s705 = scalar_lea.vmem [#allocation6], %s704
        %p706 = scmp.lt.s32.totalorder %s32, 1
        %s707 = scalar_select %p706, %s32, 1
        %s708 = smul.addr %s707, 2
        %s709 = smul.addr %s708, 8
        %s710 = scalar_lea.vmem %s4, %s709
        %p711 = scmp.lt.s32.totalorder %s32, 1
        %s712 = scalar_select %p711, %s32, 1
        %s713 = smul.addr %s712, 2
        %s714 = smul.addr %s713, 8
        %s715 = scalar_lea.vmem %s5, %s714
        %p716 = scmp.lt.s32.totalorder %s32, 1
        %s717 = scalar_select %p716, %s32, 1
        %s718 = smul.addr %s717, 2
        %s719 = smul.addr %s718, 8
        %s720 = scalar_lea.vmem %s6, %s719
        %s721 = sand.u32 %s224, 1
        %s722 = scalar_lea.sflag [#allocation8], %s721
        %s723 = sand.u32 %s224, 1
        %s724 = smul.addr %s723, 8
        %s725 = scalar_lea.vmem [#allocation7], %s724
        // Predicated region
        $region41: #{tpu_custom_call.1} parent=31 // pred_check
          %p726 = pneg %p128
        $region42: #{tpu_custom_call.1} parent=31 // pred_check_branch
          %728 = sbr.rel (%p726) target = $region44
        $region43: #{tpu_custom_call.1} parent=31 // pred_region
          %s730 = ssub.s32 256, 256
          %731 = vsyncadd %s702, %s730
          %s732 = smul.addr %s32, 2
          %s733 = smul.addr %s732, 128
          %s734 = scalar_lea.hbm %s3, %s733
          %s735 = sshll.u32 %s705, 4
          %s736 = int_to_ptr.vmem [resolvable:$true] %s735
          %741 = dma.vmem_to_hbm [thread:$0]  %s736, 256, %s734, %s702, 128, 128, 8
        $region44: #{tpu_custom_call.1} parent=31 // pred_fallthru
          _
        // Predicated region
        $region45: #{tpu_custom_call.1} parent=31 // pred_check
          %p742 = pneg %p154
        $region46: #{tpu_custom_call.1} parent=31 // pred_check_branch
          %744 = sbr.rel (%p742) target = $region48
        $region47: #{tpu_custom_call.1} parent=31 // pred_region
          _
        $region48: #{tpu_custom_call.1} parent=31 // pred_fallthru
          _
        // Predicated region
        $region49: #{tpu_custom_call.1} parent=31 // pred_check
          %p745 = pneg %p180
        $region50: #{tpu_custom_call.1} parent=31 // pred_check_branch
          %747 = sbr.rel (%p745) target = $region52
        $region51: #{tpu_custom_call.1} parent=31 // pred_region
          _
        $region52: #{tpu_custom_call.1} parent=31 // pred_fallthru
          _
        // Predicated region
        $region53: #{tpu_custom_call.1} parent=31 // pred_check
          %p748 = pneg %p206
        $region54: #{tpu_custom_call.1} parent=31 // pred_check_branch
          %750 = sbr.rel (%p748) target = $region56
        $region55: #{tpu_custom_call.1} parent=31 // pred_region
          _
        $region56: #{tpu_custom_call.1} parent=31 // pred_fallthru
          _
        // Predicated region
        $region57: #{tpu_custom_call.1} parent=31 // pred_check
          %p751 = pneg %p234
        $region58: #{tpu_custom_call.1} parent=31 // pred_check_branch
          %753 = sbr.rel (%p751) target = $region60
        $region59: #{tpu_custom_call.1} parent=31 // pred_region
          %s755 = ssub.s32 128, 128
          %756 = vsyncadd %s722, %s755
          %s757 = smul.addr %s32, 8
          %s758 = sadd.s32 %s33, %s757
          %s759 = smul.addr %s758, 64
          %s760 = scalar_lea.hbm %s7, %s759
          %s761 = sshll.u32 %s725, 4
          %s762 = int_to_ptr.vmem [resolvable:$true] %s761
          %767 = dma.vmem_to_hbm [thread:$0]  %s762, 128, %s760, %s722, 64, 256, 4
        $region60: #{tpu_custom_call.1} parent=31 // pred_fallthru
          _
      $region32: #{tpu_custom_call.1} parent=5 // pred_fallthru
        _
      %p768 = scmp.le.s32.totalorder 2, %s23
      // Predicated region
      $region61: #{tpu_custom_call.1} parent=5 // pred_check
        %p769 = pneg %p768
      $region62: #{tpu_custom_call.1} parent=5 // pred_check_branch
        %771 = sbr.rel (%p769) target = $region64
      $region63: #{tpu_custom_call.1} parent=5 // pred_region
        %s772 = ssub.s32 %s23, 2
        // Predicated region
        $region65: #{tpu_custom_call.1} parent=63 // pred_check
          %p773 = pneg %p134
        $region66: #{tpu_custom_call.1} parent=63 // pred_check_branch
          %775 = sbr.rel (%p773) target = $region68
        $region67: #{tpu_custom_call.1} parent=63 // pred_region
          %s776 = sand.u32 %s119, 1
          %s777 = scalar_lea.sflag [#allocation5], %s776
          %s778 = sand.u32 %s119, 1
          %s779 = smul.addr %s778, 16
          %s780 = scalar_lea.vmem [#allocation6], %s779
          %781 = dma.done %s777, 256
        $region68: #{tpu_custom_call.1} parent=63 // pred_fallthru
          _
        // Predicated region
        $region69: #{tpu_custom_call.1} parent=63 // pred_check
          %p782 = pneg %p160
        $region70: #{tpu_custom_call.1} parent=63 // pred_check_branch
          %784 = sbr.rel (%p782) target = $region72
        $region71: #{tpu_custom_call.1} parent=63 // pred_region
          %p785 = scmp.lt.s32.totalorder %s34, 1
          %s786 = scalar_select %p785, %s34, 1
          %s787 = smul.addr %s786, 2
          %s788 = smul.addr %s787, 8
          %s789 = scalar_lea.vmem %s4, %s788
        $region72: #{tpu_custom_call.1} parent=63 // pred_fallthru
          _
        // Predicated region
        $region73: #{tpu_custom_call.1} parent=63 // pred_check
          %p790 = pneg %p186
        $region74: #{tpu_custom_call.1} parent=63 // pred_check_branch
          %792 = sbr.rel (%p790) target = $region76
        $region75: #{tpu_custom_call.1} parent=63 // pred_region
          %p793 = scmp.lt.s32.totalorder %s34, 1
          %s794 = scalar_select %p793, %s34, 1
          %s795 = smul.addr %s794, 2
          %s796 = smul.addr %s795, 8
          %s797 = scalar_lea.vmem %s5, %s796
        $region76: #{tpu_custom_call.1} parent=63 // pred_fallthru
          _
        // Predicated region
        $region77: #{tpu_custom_call.1} parent=63 // pred_check
          %p798 = pneg %p212
        $region78: #{tpu_custom_call.1} parent=63 // pred_check_branch
          %800 = sbr.rel (%p798) target = $region80
        $region79: #{tpu_custom_call.1} parent=63 // pred_region
          %p801 = scmp.lt.s32.totalorder %s34, 1
          %s802 = scalar_select %p801, %s34, 1
          %s803 = smul.addr %s802, 2
          %s804 = smul.addr %s803, 8
          %s805 = scalar_lea.vmem %s6, %s804
        $region80: #{tpu_custom_call.1} parent=63 // pred_fallthru
          _
        // Predicated region
        $region81: #{tpu_custom_call.1} parent=63 // pred_check
          %p806 = pneg %p240
        $region82: #{tpu_custom_call.1} parent=63 // pred_check_branch
          %808 = sbr.rel (%p806) target = $region84
        $region83: #{tpu_custom_call.1} parent=63 // pred_region
          %s809 = sand.u32 %s225, 1
          %s810 = scalar_lea.sflag [#allocation8], %s809
          %s811 = sand.u32 %s225, 1
          %s812 = smul.addr %s811, 8
          %s813 = scalar_lea.vmem [#allocation7], %s812
          %814 = dma.done %s810, 128
        $region84: #{tpu_custom_call.1} parent=63 // pred_fallthru
          _
      $region64: #{tpu_custom_call.1} parent=5 // pred_fallthru
        _
    $region6: #{tpu_custom_call.1} parent=1 // loop_footer
      %s27 = sadd.s32 1, %s23
    $region7: #{tpu_custom_call.1} parent=1 // loop_footer_branch
      %22 = sbr.rel target = $region3
    $region8: #{tpu_custom_call.1} parent=1 // loop_exit
      _
    %815 = vsyncpa [#allocation4], 1
    %s816 = scalar_lea.sflag [#allocation4], 1
    %817 = vsyncpa %s816, 1
    %818 = vsyncpa [#allocation5], 1
    %s819 = scalar_lea.sflag [#allocation5], 1
    %820 = vsyncpa %s819, 1
    %821 = vsyncpa [#allocation8], 1
    %s822 = scalar_lea.sflag [#allocation8], 1
    %823 = vsyncpa %s822, 1

</llo_original>
